<compile_context>
chip_gen: v6e
topology: v6e:2x2x1
jax: 0.10.0
libtpu: 0.0.40
codegen_flags: <defaults>
</compile_context>

<pallas_src>
import jax
import jax.numpy as jnp
from jax.experimental import pallas as pl
from jax.experimental.pallas import tpu as pltpu

LANES = 128          # vreg lane width
MAX_TILE_ROWS = 1024 # sweet spot across v5e/v6e/v7x (85-86% of HBM roofline)
NUM_SPLITS = 2       # leading "parallel" grid axis (2 TensorCores on v7x)


def _round_up(a, b):
    return (a + b - 1) // b * b


def _sublane_multiple(dtype):
    # min second-minor tile multiple per element width (f32:8, bf16:16, 8-bit:32)
    return {4: 8, 2: 16, 1: 32}.get(jnp.dtype(dtype).itemsize, 8)


def _wl1_kernel(x_ref, w_ref, o_ref, s1_ref, s2_ref, c1_ref, c2_ref):
    """Partial sums for the weighted L1 loss, one output tile per chunk.

    Grid = (NUM_SPLITS, tiles_per_chunk): axis 0 is "parallel" (megacore),
    axis 1 is the sequential accumulation axis. Scratch accumulators are
    (tile_rows, 128) f32, updated purely elementwise each step; the finalize
    branch folds each one to an (8, 128) partial tile written to the output.
    """
    t = pl.program_id(1)

    @pl.when(t == 0)
    def _():
        s1_ref[...] = jnp.zeros_like(s1_ref)
        s2_ref[...] = jnp.zeros_like(s2_ref)
        c1_ref[...] = jnp.zeros_like(c1_ref)
        c2_ref[...] = jnp.zeros_like(c2_ref)

    x = x_ref[...].astype(jnp.float32)
    w = w_ref[...].astype(jnp.float32)

    is_zero = w == 0.0
    is_pos = w > 0.0

    # |x * (w == 0)|     ->  |x|     where w == 0, else 0
    s1_ref[...] += jnp.where(is_zero, jnp.abs(x), 0.0)
    # |x * (w > 0) - w|  ->  |x - w| where w > 0,  else |w|
    s2_ref[...] += jnp.where(is_pos, jnp.abs(x - w), jnp.abs(w))
    # element counts for num1 / num2
    c1_ref[...] += jnp.where(is_zero, 1.0, 0.0)
    c2_ref[...] += jnp.where(is_pos, 1.0, 0.0)

    @pl.when(t == pl.num_programs(1) - 1)
    def _():
        def partial_tile(acc_ref):
            a = acc_ref[...]                               # (tile_rows, 128)
            return a.reshape(a.shape[0] // 8, 8, LANES).sum(axis=0)  # (8, 128)

        o_ref[0] = partial_tile(s1_ref)
        o_ref[1] = partial_tile(s2_ref)
        o_ref[2] = partial_tile(c1_ref)
        o_ref[3] = partial_tile(c2_ref)


@jax.jit
def wl1_loss(inputs, weight):
    x = inputs.reshape(-1)
    w = weight.reshape(-1)
    n = x.shape[0]

    sub = max(_sublane_multiple(x.dtype), _sublane_multiple(w.dtype))
    rows_needed = pl.cdiv(n, LANES)
    tile_rows = min(MAX_TILE_ROWS, _round_up(rows_needed, sub))
    total_tiles = _round_up(pl.cdiv(rows_needed, tile_rows), NUM_SPLITS)
    tiles_per_chunk = total_tiles // NUM_SPLITS
    total_rows = total_tiles * tile_rows
    pad = total_rows * LANES - n

    # Skipped (no extra HBM copy) whenever n is already tile-aligned.
    # TODO(synk): for unaligned large inputs, an in-kernel tail mask via
    # broadcasted_iota would avoid this full-copy pad as well.
    if pad:
        x = jnp.pad(x, (0, pad))
        w = jnp.pad(w, (0, pad))

    x2 = x.reshape(total_rows, LANES)
    w2 = w.reshape(total_rows, LANES)

    in_spec = pl.BlockSpec((tile_rows, LANES),
                           lambda c, t: (c * tiles_per_chunk + t, 0))
    out_spec = pl.BlockSpec((4, 8, LANES), lambda c, t: (c, 0, 0))

    parts = pl.pallas_call(
        _wl1_kernel,
        out_shape=jax.ShapeDtypeStruct((NUM_SPLITS * 4, 8, LANES), jnp.float32),
        grid_spec=pltpu.PrefetchScalarGridSpec(
            num_scalar_prefetch=0,
            grid=(NUM_SPLITS, tiles_per_chunk),
            in_specs=[in_spec, in_spec],
            out_specs=out_spec,
            scratch_shapes=[pltpu.VMEM((tile_rows, LANES), jnp.float32)] * 4,
        ),
        compiler_params=pltpu.CompilerParams(
            dimension_semantics=("parallel", "arbitrary")),
    )(x2, w2)

    # Tiny final reduction + scalar math in the wrapper.
    sums = parts.reshape(NUM_SPLITS, 4, 8, LANES).sum(axis=(0, 2, 3))
    s1, s2 = sums[0], sums[1]
    num1 = sums[2] - pad   # padded weight == 0 only inflates num1
    num2 = sums[3]
    return s1 / (num1 + 0.001) + s2 / (num2 + 0.001)


def wl1_loss_ref(inputs, weight):
    """Pure-JAX reference mirroring the PyTorch forward."""
    inputs = inputs.astype(jnp.float32)
    weight = weight.astype(jnp.float32)
    w2 = (weight == 0).astype(jnp.float32)
    w1 = (weight > 0).astype(jnp.float32)
    num1 = jnp.sum(w2)
    num2 = jnp.sum(w1)
    return (jnp.sum(jnp.abs(inputs * w2)) / (num1 + 0.001)
            + jnp.sum(jnp.abs(inputs * w1 - weight)) / (num2 + 0.001))


if __name__ == "__main__":
    key = jax.random.PRNGKey(0)
    k_x, k_w, k_sel = jax.random.split(key, 3)

    shape = (2, 4, 16, 16)  # NCHW, like the PyTorch call sites
    inputs = jax.random.normal(k_x, shape, dtype=jnp.float32)

    # Weight map with zeros, positives, and a few negatives so every branch
    # of the loss (w==0, w>0, w<0) is exercised.
    raw = jax.random.normal(k_w, shape, dtype=jnp.float32)
    sel = jax.random.uniform(k_sel, shape)
    weight = jnp.where(sel < 0.5, 0.0,
                       jnp.where(sel < 0.9, jnp.abs(raw), -jnp.abs(raw)))

    loss = jax.block_until_ready(wl1_loss(inputs, weight))
    loss_ref = jax.block_until_ready(wl1_loss_ref(inputs, weight))

    assert jnp.allclose(loss, loss_ref, rtol=1e-5, atol=1e-5), (loss, loss_ref)
    print("KERNEL_OK")
</pallas_src>

<mosaic_0001>
module attributes {stable_mosaic.version = 11 : i64} {
  func.func @_wl1_kernel(%arg0: i32, %arg1: i32, %arg2: memref<16x128xf32, #tpu.memory_space<vmem>>, %arg3: memref<16x128xf32, #tpu.memory_space<vmem>>, %arg4: memref<4x8x128xf32, #tpu.memory_space<vmem>>, %arg5: memref<16x128xf32, #tpu.memory_space<vmem>>, %arg6: memref<16x128xf32, #tpu.memory_space<vmem>>, %arg7: memref<16x128xf32, #tpu.memory_space<vmem>>, %arg8: memref<16x128xf32, #tpu.memory_space<vmem>>) attributes {dimension_semantics = [#tpu.dimension_semantics<parallel>, #tpu.dimension_semantics<arbitrary>], iteration_bounds = array<i64: 2, 1>, scalar_prefetch = 0 : i64, scratch_operands = 4 : i64, tpu.core_type = #tpu.core_type<tc>, window_params = [{transform_indices = @transform_0, window_bounds = array<i64: 16, 128>}, {transform_indices = @transform_1, window_bounds = array<i64: 16, 128>}, {transform_indices = @transform_2, window_bounds = array<i64: 4, 8, 128>}]} {
    %c0_i32 = arith.constant 0 : i32
    %0 = arith.cmpi eq, %arg1, %c0_i32 : i32
    %1 = arith.extui %0 : i1 to i32
    %c0_i32_0 = arith.constant 0 : i32
    %2 = arith.cmpi ne, %1, %c0_i32_0 : i32
    scf.if %2 {
      %cst_28 = arith.constant 0.000000e+00 : f32
      %37 = vector.broadcast %cst_28 : f32 to vector<16x128xf32>
      %c0_29 = arith.constant 0 : index
      %c0_30 = arith.constant 0 : index
      %38 = vector.load %arg5[%c0_29, %c0_30] : memref<16x128xf32, #tpu.memory_space<vmem>>, vector<16x128xf32>
      tpu.vector_store %arg5[%c0_29, %c0_30], %37 {strides = array<i32>} : memref<16x128xf32, #tpu.memory_space<vmem>>, vector<16x128xf32>,
      %cst_31 = arith.constant 0.000000e+00 : f32
      %39 = vector.broadcast %cst_31 : f32 to vector<16x128xf32>
      %c0_32 = arith.constant 0 : index
      %c0_33 = arith.constant 0 : index
      %40 = vector.load %arg6[%c0_32, %c0_33] : memref<16x128xf32, #tpu.memory_space<vmem>>, vector<16x128xf32>
      tpu.vector_store %arg6[%c0_32, %c0_33], %39 {strides = array<i32>} : memref<16x128xf32, #tpu.memory_space<vmem>>, vector<16x128xf32>,
      %cst_34 = arith.constant 0.000000e+00 : f32
      %41 = vector.broadcast %cst_34 : f32 to vector<16x128xf32>
      %c0_35 = arith.constant 0 : index
      %c0_36 = arith.constant 0 : index
      %42 = vector.load %arg7[%c0_35, %c0_36] : memref<16x128xf32, #tpu.memory_space<vmem>>, vector<16x128xf32>
      tpu.vector_store %arg7[%c0_35, %c0_36], %41 {strides = array<i32>} : memref<16x128xf32, #tpu.memory_space<vmem>>, vector<16x128xf32>,
      %cst_37 = arith.constant 0.000000e+00 : f32
      %43 = vector.broadcast %cst_37 : f32 to vector<16x128xf32>
      %c0_38 = arith.constant 0 : index
      %c0_39 = arith.constant 0 : index
      %44 = vector.load %arg8[%c0_38, %c0_39] : memref<16x128xf32, #tpu.memory_space<vmem>>, vector<16x128xf32>
      tpu.vector_store %arg8[%c0_38, %c0_39], %43 {strides = array<i32>} : memref<16x128xf32, #tpu.memory_space<vmem>>, vector<16x128xf32>,
    } else {
    }
    %c0 = arith.constant 0 : index
    %c0_1 = arith.constant 0 : index
    %3 = vector.load %arg2[%c0, %c0_1] : memref<16x128xf32, #tpu.memory_space<vmem>>, vector<16x128xf32>
    %c0_2 = arith.constant 0 : index
    %c0_3 = arith.constant 0 : index
    %4 = vector.load %arg3[%c0_2, %c0_3] : memref<16x128xf32, #tpu.memory_space<vmem>>, vector<16x128xf32>
    %cst = arith.constant 0.000000e+00 : f32
    %5 = vector.broadcast %cst : f32 to vector<16x128xf32>
    %6 = arith.cmpf oeq, %4, %5 : vector<16x128xf32>
    %cst_4 = arith.constant 0.000000e+00 : f32
    %7 = vector.broadcast %cst_4 : f32 to vector<16x128xf32>
    %8 = arith.cmpf ogt, %4, %7 : vector<16x128xf32>
    %c0_5 = arith.constant 0 : index
    %c0_6 = arith.constant 0 : index
    %9 = vector.load %arg5[%c0_5, %c0_6] : memref<16x128xf32, #tpu.memory_space<vmem>>, vector<16x128xf32>
    %10 = math.absf %3 : vector<16x128xf32>
    %cst_7 = arith.constant 0.000000e+00 : f32
    %11 = vector.broadcast %cst_7 : f32 to vector<16x128xf32>
    %12 = arith.select %6, %10, %11 : vector<16x128xi1>, vector<16x128xf32>
    %13 = arith.addf %9, %12 : vector<16x128xf32>
    %c0_8 = arith.constant 0 : index
    %c0_9 = arith.constant 0 : index
    %14 = vector.load %arg5[%c0_8, %c0_9] : memref<16x128xf32, #tpu.memory_space<vmem>>, vector<16x128xf32>
    tpu.vector_store %arg5[%c0_8, %c0_9], %13 {strides = array<i32>} : memref<16x128xf32, #tpu.memory_space<vmem>>, vector<16x128xf32>,
    %c0_10 = arith.constant 0 : index
    %c0_11 = arith.constant 0 : index
    %15 = vector.load %arg6[%c0_10, %c0_11] : memref<16x128xf32, #tpu.memory_space<vmem>>, vector<16x128xf32>
    %16 = arith.subf %3, %4 : vector<16x128xf32>
    %17 = math.absf %16 : vector<16x128xf32>
    %18 = math.absf %4 : vector<16x128xf32>
    %19 = arith.select %8, %17, %18 : vector<16x128xi1>, vector<16x128xf32>
    %20 = arith.addf %15, %19 : vector<16x128xf32>
    %c0_12 = arith.constant 0 : index
    %c0_13 = arith.constant 0 : index
    %21 = vector.load %arg6[%c0_12, %c0_13] : memref<16x128xf32, #tpu.memory_space<vmem>>, vector<16x128xf32>
    tpu.vector_store %arg6[%c0_12, %c0_13], %20 {strides = array<i32>} : memref<16x128xf32, #tpu.memory_space<vmem>>, vector<16x128xf32>,
    %c0_14 = arith.constant 0 : index
    %c0_15 = arith.constant 0 : index
    %22 = vector.load %arg7[%c0_14, %c0_15] : memref<16x128xf32, #tpu.memory_space<vmem>>, vector<16x128xf32>
    %cst_16 = arith.constant 1.000000e+00 : f32
    %cst_17 = arith.constant 0.000000e+00 : f32
    %23 = vector.broadcast %cst_16 : f32 to vector<16x128xf32>
    %24 = vector.broadcast %cst_17 : f32 to vector<16x128xf32>
    %25 = arith.select %6, %23, %24 : vector<16x128xi1>, vector<16x128xf32>
    %26 = arith.addf %22, %25 : vector<16x128xf32>
    %c0_18 = arith.constant 0 : index
    %c0_19 = arith.constant 0 : index
    %27 = vector.load %arg7[%c0_18, %c0_19] : memref<16x128xf32, #tpu.memory_space<vmem>>, vector<16x128xf32>
    tpu.vector_store %arg7[%c0_18, %c0_19], %26 {strides = array<i32>} : memref<16x128xf32, #tpu.memory_space<vmem>>, vector<16x128xf32>,
    %c0_20 = arith.constant 0 : index
    %c0_21 = arith.constant 0 : index
    %28 = vector.load %arg8[%c0_20, %c0_21] : memref<16x128xf32, #tpu.memory_space<vmem>>, vector<16x128xf32>
    %cst_22 = arith.constant 1.000000e+00 : f32
    %cst_23 = arith.constant 0.000000e+00 : f32
    %29 = vector.broadcast %cst_22 : f32 to vector<16x128xf32>
    %30 = vector.broadcast %cst_23 : f32 to vector<16x128xf32>
    %31 = arith.select %8, %29, %30 : vector<16x128xi1>, vector<16x128xf32>
    %32 = arith.addf %28, %31 : vector<16x128xf32>
    %c0_24 = arith.constant 0 : index
    %c0_25 = arith.constant 0 : index
    %33 = vector.load %arg8[%c0_24, %c0_25] : memref<16x128xf32, #tpu.memory_space<vmem>>, vector<16x128xf32>
    tpu.vector_store %arg8[%c0_24, %c0_25], %32 {strides = array<i32>} : memref<16x128xf32, #tpu.memory_space<vmem>>, vector<16x128xf32>,
    %c0_i32_26 = arith.constant 0 : i32
    %34 = arith.cmpi eq, %arg1, %c0_i32_26 : i32
    %35 = arith.extui %34 : i1 to i32
    %c0_i32_27 = arith.constant 0 : i32
    %36 = arith.cmpi ne, %35, %c0_i32_27 : i32
    scf.if %36 {
      %c0_28 = arith.constant 0 : index
      %c0_29 = arith.constant 0 : index
      %37 = vector.load %arg5[%c0_28, %c0_29] : memref<16x128xf32, #tpu.memory_space<vmem>>, vector<16x128xf32>
      %38 = vector.shape_cast %37 : vector<16x128xf32> to vector<2x8x128xf32>
      %cst_30 = arith.constant dense<0.000000e+00> : vector<8x128xf32>
      %39 = vector.multi_reduction <add>, %38, %cst_30 [0] : vector<2x8x128xf32> to vector<8x128xf32>
      %c0_31 = arith.constant 0 : index
      %c0_32 = arith.constant 0 : index
      %c0_33 = arith.constant 0 : index
      %40 = vector.load %arg4[%c0_31, %c0_32, %c0_33] : memref<4x8x128xf32, #tpu.memory_space<vmem>>, vector<1x8x128xf32>
      %41 = vector.shape_cast %40 : vector<1x8x128xf32> to vector<8x128xf32>
      %42 = vector.shape_cast %39 : vector<8x128xf32> to vector<1x8x128xf32>
      tpu.vector_store %arg4[%c0_31, %c0_32, %c0_33], %42 {strides = array<i32>} : memref<4x8x128xf32, #tpu.memory_space<vmem>>, vector<1x8x128xf32>,
      %c0_34 = arith.constant 0 : index
      %c0_35 = arith.constant 0 : index
      %43 = vector.load %arg6[%c0_34, %c0_35] : memref<16x128xf32, #tpu.memory_space<vmem>>, vector<16x128xf32>
      %44 = vector.shape_cast %43 : vector<16x128xf32> to vector<2x8x128xf32>
      %cst_36 = arith.constant dense<0.000000e+00> : vector<8x128xf32>
      %45 = vector.multi_reduction <add>, %44, %cst_36 [0] : vector<2x8x128xf32> to vector<8x128xf32>
      %c1 = arith.constant 1 : index
      %c0_37 = arith.constant 0 : index
      %c0_38 = arith.constant 0 : index
      %46 = vector.load %arg4[%c1, %c0_37, %c0_38] : memref<4x8x128xf32, #tpu.memory_space<vmem>>, vector<1x8x128xf32>
      %47 = vector.shape_cast %46 : vector<1x8x128xf32> to vector<8x128xf32>
      %48 = vector.shape_cast %45 : vector<8x128xf32> to vector<1x8x128xf32>
      tpu.vector_store %arg4[%c1, %c0_37, %c0_38], %48 {strides = array<i32>} : memref<4x8x128xf32, #tpu.memory_space<vmem>>, vector<1x8x128xf32>,
      %c0_39 = arith.constant 0 : index
      %c0_40 = arith.constant 0 : index
      %49 = vector.load %arg7[%c0_39, %c0_40] : memref<16x128xf32, #tpu.memory_space<vmem>>, vector<16x128xf32>
      %50 = vector.shape_cast %49 : vector<16x128xf32> to vector<2x8x128xf32>
      %cst_41 = arith.constant dense<0.000000e+00> : vector<8x128xf32>
      %51 = vector.multi_reduction <add>, %50, %cst_41 [0] : vector<2x8x128xf32> to vector<8x128xf32>
      %c2 = arith.constant 2 : index
      %c0_42 = arith.constant 0 : index
      %c0_43 = arith.constant 0 : index
      %52 = vector.load %arg4[%c2, %c0_42, %c0_43] : memref<4x8x128xf32, #tpu.memory_space<vmem>>, vector<1x8x128xf32>
      %53 = vector.shape_cast %52 : vector<1x8x128xf32> to vector<8x128xf32>
      %54 = vector.shape_cast %51 : vector<8x128xf32> to vector<1x8x128xf32>
      tpu.vector_store %arg4[%c2, %c0_42, %c0_43], %54 {strides = array<i32>} : memref<4x8x128xf32, #tpu.memory_space<vmem>>, vector<1x8x128xf32>,
      %c0_44 = arith.constant 0 : index
      %c0_45 = arith.constant 0 : index
      %55 = vector.load %arg8[%c0_44, %c0_45] : memref<16x128xf32, #tpu.memory_space<vmem>>, vector<16x128xf32>
      %56 = vector.shape_cast %55 : vector<16x128xf32> to vector<2x8x128xf32>
      %cst_46 = arith.constant dense<0.000000e+00> : vector<8x128xf32>
      %57 = vector.multi_reduction <add>, %56, %cst_46 [0] : vector<2x8x128xf32> to vector<8x128xf32>
      %c3 = arith.constant 3 : index
      %c0_47 = arith.constant 0 : index
      %c0_48 = arith.constant 0 : index
      %58 = vector.load %arg4[%c3, %c0_47, %c0_48] : memref<4x8x128xf32, #tpu.memory_space<vmem>>, vector<1x8x128xf32>
      %59 = vector.shape_cast %58 : vector<1x8x128xf32> to vector<8x128xf32>
      %60 = vector.shape_cast %57 : vector<8x128xf32> to vector<1x8x128xf32>
      tpu.vector_store %arg4[%c3, %c0_47, %c0_48], %60 {strides = array<i32>} : memref<4x8x128xf32, #tpu.memory_space<vmem>>, vector<1x8x128xf32>,
    } else {
    }
    return
  }
  func.func @transform_0(%arg0: i32, %arg1: i32) -> (i32, i32) {
    %c1_i32 = arith.constant 1 : i32
    %0 = arith.muli %arg0, %c1_i32 : i32
    %1 = arith.addi %0, %arg1 : i32
    %c0_i32 = arith.constant 0 : i32
    %c0_i32_0 = arith.constant 0 : i32
    return %1, %c0_i32 : i32, i32
  }
  func.func @transform_1(%arg0: i32, %arg1: i32) -> (i32, i32) {
    %c1_i32 = arith.constant 1 : i32
    %0 = arith.muli %arg0, %c1_i32 : i32
    %1 = arith.addi %0, %arg1 : i32
    %c0_i32 = arith.constant 0 : i32
    %c0_i32_0 = arith.constant 0 : i32
    return %1, %c0_i32 : i32, i32
  }
  func.func @transform_2(%arg0: i32, %arg1: i32) -> (i32, i32, i32) {
    %c0_i32 = arith.constant 0 : i32
    %c0_i32_0 = arith.constant 0 : i32
    %c0_i32_1 = arith.constant 0 : i32
    return %arg0, %c0_i32, %c0_i32_0 : i32, i32, i32
  }
}

</mosaic_0001>

<llo_original>
// kernel: wl1_loss.1
$region0: #{wl1_loss.1}
  #allocation0 [shape = 'u32[]', space=smem, size = 0x4, offset = 0x4, fixed_abs, tag = 'smem constant byte address 0x4 - core index']
  #allocation1 [shape = 'u32[144,128]{1,0:T(1,128)}', space=vmem, size = 0x12000, scoped, tag = 'internal scratch']
  #allocation2 [shape = 'f32[16,128]{1,0:T(8,128)}', space=vmem, size = 0x2000, scoped, tag = 'scratch operand']
  #allocation3 [shape = 'f32[16,128]{1,0:T(8,128)}', space=vmem, size = 0x2000, scoped, tag = 'scratch operand']
  #allocation4 [shape = 'f32[16,128]{1,0:T(8,128)}', space=vmem, size = 0x2000, scoped, tag = 'scratch operand']
  #allocation5 [shape = 'f32[16,128]{1,0:T(8,128)}', space=vmem, size = 0x2000, scoped, tag = 'scratch operand']
  %s0 = inlined_call_operand.vmem [shape: f32[32,128], index: 0, kind: input, shape index: {}]
  %s1 = inlined_call_operand.vmem [shape: f32[32,128], index: 1, kind: input, shape index: {}]
  %s2 = inlined_call_operand.vmem [shape: f32[8,8,128], index: 2, kind: output, shape index: {}]
  %s3 = sld [smem:[#allocation0]]
  $region49: #{wl1_loss.1} parent=0
    _
  %s5 = ssub.s32 1, %s3
  %s6 = scalar_select 0, %s5, %s3
  loop: start=0, step=1, limit=4
  $region2: #{wl1_loss.1} parent=0 // loop_pre_header
    _
  $region3: #{wl1_loss.1} parent=0 // loop_header
    %s8 = sphi 0, %s12
    %p9 = scmp.ge.s32.totalorder %s8, 4
    %s15 = sphi 0, %s27
    %s16 = sphi 0, %s23
    %s17 = sphi 0, %s15
    %s18 = sphi 0, %s16
    %s19 = sphi 0, %s17
    %s20 = sphi 0, %s18
    %s32 = sphi 0, %s34
    %s35 = sphi 0, %s32
    %s36 = sphi 0, %s35
    %s52 = sphi 0, %s36
    %s60 = sphi 0, %s62
    %s63 = sphi 0, %s60
    %s64 = sphi 0, %s63
    %s80 = sphi 0, %s64
    %s86 = sphi 0, %s88
    %s89 = sphi 0, %s86
    %s90 = sphi 0, %s89
    %s106 = sphi 0, %s90
  $region4: #{wl1_loss.1} parent=0 // loop_header_branch
    %11 = sbr.rel (%p9) target = $region8
  $region5: #{wl1_loss.1} parent=0 // loop_body
    %s13 = ssub.s32 %s8, 1
    %s14 = ssub.s32 %s8, 2
    %s21 = sadd.s32 1, %s16
    %p22 = scmp.ge.s32.totalorder %s21, 1
    %s23 = scalar_select %p22, 0, %s21
    %s24 = sadd.s32 1, %s15
    %s25 = scalar_select %p22, %s24, %s15
    %p26 = scmp.ge.s32.totalorder %s25, 2
    %s27 = scalar_select %p26, 0, %s25
    %s28 = sadd.s32 %s15, %s16
    %s29 = sadd.s32 %s27, %s23
    %s30 = ssub.s32 %s28, %s29
    %p31 = scmp.eq.s32.totalorder %s30, 0
    %s33 = sadd.s32 %s32, 1
    %s34 = scalar_select %p31, %s32, %s33
    %p37 = pneg %p31
    %p38 = scmp.eq.s32.totalorder %s8, 1
    %p39 = por %p37, %p38
    %p40 = scmp.ne.s32.totalorder %s32, %s35
    %p41 = scmp.eq.s32.totalorder %s8, 0
    %p42 = por %p40, %p41
    %p43 = scmp.ne.s32.totalorder %s32, %s35
    %p44 = scmp.eq.s32.totalorder %s13, 1
    %p45 = por %p43, %p44
    %p46 = scmp.ne.s32.totalorder %s35, %s36
    %p47 = scmp.eq.s32.totalorder %s13, 0
    %p48 = por %p46, %p47
    %p49 = scmp.ne.s32.totalorder %s35, %s36
    %p50 = scmp.eq.s32.totalorder %s14, 1
    %p51 = por %p49, %p50
    %p53 = scmp.ne.s32.totalorder %s36, %s52
    %p54 = scmp.eq.s32.totalorder %s14, 0
    %p55 = por %p53, %p54
    %s56 = sadd.s32 %s15, %s16
    %s57 = sadd.s32 %s27, %s23
    %s58 = ssub.s32 %s56, %s57
    %p59 = scmp.eq.s32.totalorder %s58, 0
    %s61 = sadd.s32 %s60, 1
    %s62 = scalar_select %p59, %s60, %s61
    %p65 = pneg %p59
    %p66 = scmp.eq.s32.totalorder %s8, 1
    %p67 = por %p65, %p66
    %p68 = scmp.ne.s32.totalorder %s60, %s63
    %p69 = scmp.eq.s32.totalorder %s8, 0
    %p70 = por %p68, %p69
    %p71 = scmp.ne.s32.totalorder %s60, %s63
    %p72 = scmp.eq.s32.totalorder %s13, 1
    %p73 = por %p71, %p72
    %p74 = scmp.ne.s32.totalorder %s63, %s64
    %p75 = scmp.eq.s32.totalorder %s13, 0
    %p76 = por %p74, %p75
    %p77 = scmp.ne.s32.totalorder %s63, %s64
    %p78 = scmp.eq.s32.totalorder %s14, 1
    %p79 = por %p77, %p78
    %p81 = scmp.ne.s32.totalorder %s64, %s80
    %p82 = scmp.eq.s32.totalorder %s14, 0
    %p83 = por %p81, %p82
    %s84 = ssub.s32 %s15, %s27
    %p85 = scmp.eq.s32.totalorder %s84, 0
    %s87 = sadd.s32 %s86, 1
    %s88 = scalar_select %p85, %s86, %s87
    %p91 = pneg %p85
    %p92 = scmp.eq.s32.totalorder %s8, 1
    %p93 = por %p91, %p92
    %p94 = scmp.ne.s32.totalorder %s86, %s89
    %p95 = scmp.eq.s32.totalorder %s8, 0
    %p96 = por %p94, %p95
    %p97 = scmp.ne.s32.totalorder %s86, %s89
    %p98 = scmp.eq.s32.totalorder %s13, 1
    %p99 = por %p97, %p98
    %p100 = scmp.ne.s32.totalorder %s89, %s90
    %p101 = scmp.eq.s32.totalorder %s13, 0
    %p102 = por %p100, %p101
    %p103 = scmp.ne.s32.totalorder %s89, %s90
    %p104 = scmp.eq.s32.totalorder %s14, 1
    %p105 = por %p103, %p104
    %p107 = scmp.ne.s32.totalorder %s90, %s106
    %p108 = scmp.eq.s32.totalorder %s14, 0
    %p109 = por %p107, %p108
    %p110 = scmp.le.s32.totalorder 1, %s8
    %p111 = scmp.lt.s32.totalorder %s8, 3
    %p112 = pnand %p110, %p111
    %p113 = pneg %p112
    // Predicated region
    $region9: #{wl1_loss.1} parent=5 // pred_check
      _
    $region10: #{wl1_loss.1} parent=5 // pred_check_branch
      %115 = sbr.rel (%p112) target = $region12
    $region11: #{wl1_loss.1} parent=5 // pred_region
      %s116 = ssub.s32 %s8, 1
    $region12: #{wl1_loss.1} parent=5 // pred_fallthru
      _
    %p117 = scmp.lt.s32.totalorder %s8, 2
    // Predicated region
    $region13: #{wl1_loss.1} parent=5 // pred_check
      %p118 = pneg %p117
    $region14: #{wl1_loss.1} parent=5 // pred_check_branch
      %120 = sbr.rel (%p118) target = $region16
    $region15: #{wl1_loss.1} parent=5 // pred_region
      // Predicated region
      $region17: #{wl1_loss.1} parent=15 // pred_check
        %p121 = pneg %p42
      $region18: #{wl1_loss.1} parent=15 // pred_check_branch
        %123 = sbr.rel (%p121) target = $region20
      $region19: #{wl1_loss.1} parent=15 // pred_region
        %s124 = sadd.s32 %s15, %s16
        %s125 = smul.u32 2, %s124
        %p126 = scmp.lt.s32.totalorder %s125, 3
        %s127 = scalar_select %p126, %s125, 3
        %s128 = smul.addr %s127, 8
        %s129 = scalar_lea.vmem %s0, %s128
        %s130 = sadd.s32 %s15, %s16
        %s131 = smul.u32 2, %s130
      $region20: #{wl1_loss.1} parent=15 // pred_fallthru
        _
      // Predicated region
      $region21: #{wl1_loss.1} parent=15 // pred_check
        %p132 = pneg %p70
      $region22: #{wl1_loss.1} parent=15 // pred_check_branch
        %134 = sbr.rel (%p132) target = $region24
      $region23: #{wl1_loss.1} parent=15 // pred_region
        %s135 = sadd.s32 %s15, %s16
        %s136 = smul.u32 2, %s135
        %p137 = scmp.lt.s32.totalorder %s136, 3
        %s138 = scalar_select %p137, %s136, 3
        %s139 = smul.addr %s138, 8
        %s140 = scalar_lea.vmem %s1, %s139
        %s141 = sadd.s32 %s15, %s16
        %s142 = smul.u32 2, %s141
      $region24: #{wl1_loss.1} parent=15 // pred_fallthru
        _
    $region16: #{wl1_loss.1} parent=5 // pred_fallthru
      _
    %p143 = scmp.le.s32.totalorder 1, %s8
    %p144 = scmp.lt.s32.totalorder %s8, 3
    %p145 = pnand %p143, %p144
    %p146 = pneg %p145
    // Predicated region
    $region25: #{wl1_loss.1} parent=5 // pred_check
      _
    $region26: #{wl1_loss.1} parent=5 // pred_check_branch
      %148 = sbr.rel (%p145) target = $region28
    $region27: #{wl1_loss.1} parent=5 // pred_region
      %s149 = ssub.s32 %s8, 1
      %s150 = sadd.s32 %s17, %s18
      %s151 = smul.u32 2, %s150
      %p152 = scmp.lt.s32.totalorder %s151, 3
      %s153 = scalar_select %p152, %s151, 3
      %s154 = smul.addr %s153, 8
      %s155 = scalar_lea.vmem %s0, %s154
      %p156 = pneg %p48
      %p157 = pneg %p45
      %s158 = sadd.s32 %s17, %s18
      %s159 = smul.u32 2, %s158
      %p160 = scmp.lt.s32.totalorder %s159, 3
      %s161 = scalar_select %p160, %s159, 3
      %s162 = smul.addr %s161, 8
      %s163 = scalar_lea.vmem %s1, %s162
      %p164 = pneg %p76
      %p165 = pneg %p73
      %p166 = pneg %p102
      %p167 = pneg %p99
      %s168 = smul.u32 4, %s17
      %p169 = scmp.lt.s32.totalorder %s168, 7
      %s170 = scalar_select %p169, %s168, 7
      %s171 = smul.addr %s170, 8
      %s172 = scalar_lea.vmem %s2, %s171
      %s173 = sadd.s32 %s17, %s18
      %s174 = smul.u32 2, %s173
      %p175 = scmp.lt.s32.totalorder %s174, 3
      %s176 = scalar_select %p175, %s174, 3
      %s177 = smul.addr %s176, 8
      %s178 = scalar_lea.vmem %s0, %s177
      %s179 = sadd.s32 %s17, %s18
      %s180 = smul.u32 2, %s179
      %s181 = sadd.s32 %s17, %s18
      %s182 = smul.u32 2, %s181
      %p183 = scmp.lt.s32.totalorder %s182, 3
      %s184 = scalar_select %p183, %s182, 3
      %s185 = smul.addr %s184, 8
      %s186 = scalar_lea.vmem %s1, %s185
      %s187 = sadd.s32 %s17, %s18
      %s188 = smul.u32 2, %s187
      %s189 = smul.u32 4, %s17
      %p190 = scmp.lt.s32.totalorder %s189, 7
      %s191 = scalar_select %p190, %s189, 7
      %s192 = smul.addr %s191, 8
      %s193 = scalar_lea.vmem %s2, %s192
      %s194 = smul.u32 4, %s17
      %p195 = scmp.eq.s32.totalorder %s18, 0
      // Predicated region
      $region29: #{wl1_loss.1} parent=27 // pred_check
        %p196 = pneg %p195
      $region30: #{wl1_loss.1} parent=27 // pred_check_branch
        %198 = sbr.rel (%p196) target = $region32
      $region31: #{wl1_loss.1} parent=27 // pred_region
        %199 = vst [vmem:[#allocation2] sm:$0xff] 0.0
        %200 = vst [vmem:[#allocation2 + $0x8] sm:$0xff] 0.0
        %201 = vst [vmem:[#allocation3] sm:$0xff] 0.0
        %202 = vst [vmem:[#allocation3 + $0x8] sm:$0xff] 0.0
        %203 = vst [vmem:[#allocation4] sm:$0xff] 0.0
        %204 = vst [vmem:[#allocation4 + $0x8] sm:$0xff] 0.0
        %205 = vst [vmem:[#allocation5] sm:$0xff] 0.0
        %206 = vst [vmem:[#allocation5 + $0x8] sm:$0xff] 0.0
      $region32: #{wl1_loss.1} parent=27 // pred_fallthru
        _
      %v207 = vld [vmem:[%s178] sm:$0xff]
      %v208 = vld [vmem:[%s178 + $0x8] sm:$0xff]
      %v209 = vld [vmem:[%s186] sm:$0xff]
      %v210 = vld [vmem:[%s186 + $0x8] sm:$0xff]
      %vm211 = vcmp.eq.f32.partialorder %v209, 0.0
      %vm212 = vcmp.eq.f32.partialorder %v210, 0.0
      %vm213 = vcmp.gt.f32.partialorder %v209, 0.0
      %vm214 = vcmp.gt.f32.partialorder %v210, 0.0
      %v215 = vld [vmem:[#allocation2] sm:$0xff]
      %v216 = vld [vmem:[#allocation2 + $0x8] sm:$0xff]
      %v217 = vand.u32 2147483647, %v207
      %v218 = vand.u32 2147483647, %v208
      %v219 = vsel %vm211, %v217, 0.0
      %v220 = vsel %vm212, %v218, 0.0
      %v221 = vadd.f32 %v215, %v219
      %v222 = vadd.f32 %v216, %v220
      %223 = vst [vmem:[#allocation2] sm:$0xff] %v221
      %224 = vst [vmem:[#allocation2 + $0x8] sm:$0xff] %v222
      %v225 = vld [vmem:[#allocation3] sm:$0xff]
      %v226 = vld [vmem:[#allocation3 + $0x8] sm:$0xff]
      %v227 = vsub.f32 %v207, %v209
      %v228 = vsub.f32 %v208, %v210
      %v229 = vand.u32 2147483647, %v227
      %v230 = vand.u32 2147483647, %v228
      %v231 = vand.u32 2147483647, %v209
      %v232 = vand.u32 2147483647, %v210
      %v233 = vsel %vm213, %v229, %v231
      %v234 = vsel %vm214, %v230, %v232
      %v235 = vadd.f32 %v225, %v233
      %v236 = vadd.f32 %v226, %v234
      %237 = vst [vmem:[#allocation3] sm:$0xff] %v235
      %238 = vst [vmem:[#allocation3 + $0x8] sm:$0xff] %v236
      %v239 = vld [vmem:[#allocation4] sm:$0xff]
      %v240 = vld [vmem:[#allocation4 + $0x8] sm:$0xff]
      %v241 = vsel %vm211, 1.0, 0.0
      %v242 = vsel %vm212, 1.0, 0.0
      %v243 = vadd.f32 %v239, %v241
      %v244 = vadd.f32 %v240, %v242
      %245 = vst [vmem:[#allocation4] sm:$0xff] %v243
      %246 = vst [vmem:[#allocation4 + $0x8] sm:$0xff] %v244
      %v247 = vld [vmem:[#allocation5] sm:$0xff]
      %v248 = vld [vmem:[#allocation5 + $0x8] sm:$0xff]
      %v249 = vsel %vm213, 1.0, 0.0
      %v250 = vsel %vm214, 1.0, 0.0
      %v251 = vadd.f32 %v247, %v249
      %v252 = vadd.f32 %v248, %v250
      %253 = vst [vmem:[#allocation5] sm:$0xff] %v251
      %254 = vst [vmem:[#allocation5 + $0x8] sm:$0xff] %v252
      // Predicated region
      $region33: #{wl1_loss.1} parent=27 // pred_check
        %p255 = pneg %p195
      $region34: #{wl1_loss.1} parent=27 // pred_check_branch
        %257 = sbr.rel (%p255) target = $region36
      $region35: #{wl1_loss.1} parent=27 // pred_region
        %v258 = vld [vmem:[#allocation2] sm:$0xff]
        %v259 = vld [vmem:[#allocation2 + $0x8] sm:$0xff]
        %v260 = vadd.f32 %v258, %v259
        %261 = vst [vmem:[%s193] sm:$0xff] %v260
        %v262 = vld [vmem:[#allocation3] sm:$0xff]
        %v263 = vld [vmem:[#allocation3 + $0x8] sm:$0xff]
        %v264 = vadd.f32 %v262, %v263
        %s265 = scalar_lea.vmem %s193, 8
        %266 = vst [vmem:[%s265] sm:$0xff] %v264
        %v267 = vld [vmem:[#allocation4] sm:$0xff]
        %v268 = vld [vmem:[#allocation4 + $0x8] sm:$0xff]
        %v269 = vadd.f32 %v267, %v268
        %s270 = scalar_lea.vmem %s193, 16
        %271 = vst [vmem:[%s270] sm:$0xff] %v269
        %v272 = vld [vmem:[#allocation5] sm:$0xff]
        %v273 = vld [vmem:[#allocation5 + $0x8] sm:$0xff]
        %v274 = vadd.f32 %v272, %v273
        %s275 = scalar_lea.vmem %s193, 24
        %276 = vst [vmem:[%s275] sm:$0xff] %v274
      $region36: #{wl1_loss.1} parent=27 // pred_fallthru
        _
      %s277 = smul.u32 4, %s17
      %p278 = scmp.lt.s32.totalorder %s277, 7
      %s279 = scalar_select %p278, %s277, 7
      %s280 = smul.addr %s279, 8
      %s281 = scalar_lea.vmem %s2, %s280
      // Predicated region
      $region37: #{wl1_loss.1} parent=27 // pred_check
        %p282 = pneg %p99
      $region38: #{wl1_loss.1} parent=27 // pred_check_branch
        %284 = sbr.rel (%p282) target = $region40
      $region39: #{wl1_loss.1} parent=27 // pred_region
        %s285 = smul.u32 4, %s17
      $region40: #{wl1_loss.1} parent=27 // pred_fallthru
        _
    $region28: #{wl1_loss.1} parent=5 // pred_fallthru
      _
    %p286 = scmp.le.s32.totalorder 2, %s8
    // Predicated region
    $region41: #{wl1_loss.1} parent=5 // pred_check
      %p287 = pneg %p286
    $region42: #{wl1_loss.1} parent=5 // pred_check_branch
      %289 = sbr.rel (%p287) target = $region44
    $region43: #{wl1_loss.1} parent=5 // pred_region
      %s290 = ssub.s32 %s8, 2
      // Predicated region
      $region45: #{wl1_loss.1} parent=43 // pred_check
        %p291 = pneg %p105
      $region46: #{wl1_loss.1} parent=43 // pred_check_branch
        %293 = sbr.rel (%p291) target = $region48
      $region47: #{wl1_loss.1} parent=43 // pred_region
        %s294 = smul.u32 4, %s19
        %p295 = scmp.lt.s32.totalorder %s294, 7
        %s296 = scalar_select %p295, %s294, 7
        %s297 = smul.addr %s296, 8
        %s298 = scalar_lea.vmem %s2, %s297
      $region48: #{wl1_loss.1} parent=43 // pred_fallthru
        _
    $region44: #{wl1_loss.1} parent=5 // pred_fallthru
      _
  $region6: #{wl1_loss.1} parent=0 // loop_footer
    %s12 = sadd.s32 1, %s8
  $region7: #{wl1_loss.1} parent=0 // loop_footer_branch
    %7 = sbr.rel target = $region3
  $region8: #{wl1_loss.1} parent=0 // loop_exit
    _

</llo_original>
